<compile_context>
chip_gen: v5e
topology: v5e:2x2
jax: 0.10.0
libtpu: 0.0.40
codegen_flags: <defaults>
</compile_context>

<pallas_src>
import jax
import jax.numpy as jnp
from jax.experimental import pallas as pl
from jax.experimental.pallas import tpu as pltpu

N_HID = 40
N_IN = 2
N_OUT = 1


def net_kernel(x_ref, wg_ref, bg_ref, w0_ref, b0_ref, w1_ref, b1_ref, o_ref):
    # x_ref: (2, TILE_B)  -- batch on lanes, features on sublanes.
    x = x_ref[...]
    x0 = x[0:1, :]                                   # (1, TILE_B)
    x1 = x[1:2, :]                                   # (1, TILE_B)

    # gate: sigmoid(Wg @ x^T + bg) computed as broadcast FMAs (VPU) + EUP sigmoid.
    wg = wg_ref[...]                                 # (2, 2)  PyTorch (out, in)
    g = jax.nn.sigmoid(wg[:, 0:1] * x0 + wg[:, 1:2] * x1 + bg_ref[...])  # (2, TILE_B)
    xg = g * x                                       # (2, TILE_B)
    xg0 = xg[0:1, :]
    xg1 = xg[1:2, :]

    # dense0 + relu: (40, TILE_B) via two broadcast FMAs (K = 2).
    w0 = w0_ref[...]                                 # (40, 2)  PyTorch (out, in)
    h = jnp.maximum(w0[:, 0:1] * xg0 + w0[:, 1:2] * xg1 + b0_ref[...], 0.0)

    # dense1: Linear(40, 1) as a sublane reduction (XLU), no N=1 matmul.
    o_ref[...] = jnp.sum(w1_ref[...] * h, axis=0, keepdims=True) + b1_ref[...]


def net_forward(x, params, *, tile_b=256):
    """x: (B, 2) float32; params in PyTorch (out, in) layout (see init_params)."""
    B = x.shape[0]
    n_blocks = pl.cdiv(B, tile_b)
    b_pad = n_blocks * tile_b

    # Lane-dense layout: transpose so batch is the last (lane) axis, pad to tile.
    x_t = jnp.pad(x.T.astype(jnp.float32), ((0, 0), (0, b_pad - B)))   # (2, B_pad)

    out_t = pl.pallas_call(
        net_kernel,
        out_shape=jax.ShapeDtypeStruct((N_OUT, b_pad), jnp.float32),
        grid=(n_blocks,),
        in_specs=[
            pl.BlockSpec((N_IN, tile_b), lambda i: (0, i)),    # x^T tile
            pl.BlockSpec((N_IN, N_IN), lambda i: (0, 0)),      # Wg   (2, 2)
            pl.BlockSpec((N_IN, 1), lambda i: (0, 0)),         # bg   (2, 1)
            pl.BlockSpec((N_HID, N_IN), lambda i: (0, 0)),     # W0   (40, 2)
            pl.BlockSpec((N_HID, 1), lambda i: (0, 0)),        # b0   (40, 1)
            pl.BlockSpec((N_HID, 1), lambda i: (0, 0)),        # W1^T (40, 1)
            pl.BlockSpec((1, 1), lambda i: (0, 0)),            # b1   (1, 1)
        ],
        out_specs=pl.BlockSpec((N_OUT, tile_b), lambda i: (0, i)),
        compiler_params=pltpu.CompilerParams(
            dimension_semantics=("parallel",),                 # 2 TCs on v7x
        ),
    )(x_t, params["wg"], params["bg"], params["w0"], params["b0"],
      params["w1c"], params["b1"])

    # Drop padding, transpose back to (B, 1).
    return out_t[:, :B].T


def init_params(key):
    """Deterministic init mimicking PyTorch nn.Linear default (uniform +-1/sqrt(fan_in)).
    Weights kept in PyTorch (out_features, in_features) layout; biases as columns."""
    k = jax.random.split(key, 6)

    def lin(kw, kb, fan_in, fan_out):
        bound = 1.0 / jnp.sqrt(fan_in)
        w = jax.random.uniform(kw, (fan_out, fan_in), jnp.float32, -bound, bound)
        b = jax.random.uniform(kb, (fan_out, 1), jnp.float32, -bound, bound)
        return w, b

    wg, bg = lin(k[0], k[1], N_IN, N_IN)      # gate:   Linear(2, 2)
    w0, b0 = lin(k[2], k[3], N_IN, N_HID)     # dense0: Linear(2, 40)
    w1, b1 = lin(k[4], k[5], N_HID, N_OUT)    # dense1: Linear(40, 1)
    return {"wg": wg, "bg": bg, "w0": w0, "b0": b0, "w1c": w1.T, "b1": b1}


def net_reference(x, p):
    """Pure-JAX reference for correctness check (PyTorch semantics)."""
    g = jax.nn.sigmoid(x @ p["wg"].T + p["bg"][:, 0]) * x
    h = jnp.maximum(g @ p["w0"].T + p["b0"][:, 0], 0.0)
    return h @ p["w1c"] + p["b1"][0, 0]


if __name__ == "__main__":
    key = jax.random.PRNGKey(0)
    k_x, k_p = jax.random.split(key)

    # In the spirit of the original script's x = linspace(-5, 5, ...), but with
    # the 2 features the module's Linear(2, ...) layers require.  B chosen so
    # the kernel exercises multiple grid steps plus padding of a ragged tail.
    B = 600
    x = jax.random.uniform(k_x, (B, N_IN), jnp.float32, -5.0, 5.0)

    params = init_params(k_p)

    out = net_forward(x, params, tile_b=256)
    out = jax.block_until_ready(out)

    ref = net_reference(x, params)
    assert out.shape == (B, N_OUT)
    assert jnp.allclose(out, ref, atol=1e-5, rtol=1e-5), "mismatch vs reference"

    print("KERNEL_OK")
</pallas_src>

<mosaic_0001>
module attributes {stable_mosaic.version = 11 : i64} {
  func.func @net_kernel(%arg0: i32, %arg1: memref<2x256xf32, #tpu.memory_space<vmem>>, %arg2: memref<2x2xf32, #tpu.memory_space<vmem>>, %arg3: memref<2x1xf32, #tpu.memory_space<vmem>>, %arg4: memref<40x2xf32, #tpu.memory_space<vmem>>, %arg5: memref<40x1xf32, #tpu.memory_space<vmem>>, %arg6: memref<40x1xf32, #tpu.memory_space<vmem>>, %arg7: memref<1x1xf32, #tpu.memory_space<vmem>>, %arg8: memref<1x256xf32, #tpu.memory_space<vmem>>) attributes {dimension_semantics = [#tpu.dimension_semantics<parallel>], iteration_bounds = array<i64: 3>, scalar_prefetch = 0 : i64, scratch_operands = 0 : i64, tpu.core_type = #tpu.core_type<tc>, window_params = [{transform_indices = @transform_0, window_bounds = array<i64: 2, 256>}, {pipeline_mode = #tpu.pipeline_mode<synchronous>, transform_indices = @transform_1, window_bounds = array<i64: 2, 2>}, {pipeline_mode = #tpu.pipeline_mode<synchronous>, transform_indices = @transform_2, window_bounds = array<i64: 2, 1>}, {pipeline_mode = #tpu.pipeline_mode<synchronous>, transform_indices = @transform_3, window_bounds = array<i64: 40, 2>}, {pipeline_mode = #tpu.pipeline_mode<synchronous>, transform_indices = @transform_4, window_bounds = array<i64: 40, 1>}, {pipeline_mode = #tpu.pipeline_mode<synchronous>, transform_indices = @transform_5, window_bounds = array<i64: 40, 1>}, {pipeline_mode = #tpu.pipeline_mode<synchronous>, transform_indices = @transform_6, window_bounds = array<i64: 1, 1>}, {transform_indices = @transform_7, window_bounds = array<i64: 1, 256>}]} {
    %c0 = arith.constant 0 : index
    %c0_0 = arith.constant 0 : index
    %0 = vector.load %arg1[%c0, %c0_0] : memref<2x256xf32, #tpu.memory_space<vmem>>, vector<2x256xf32>
    %1 = vector.extract_strided_slice %0 {offsets = [0, 0], sizes = [1, 256], strides = [1, 1]} : vector<2x256xf32> to vector<1x256xf32>
    %2 = vector.extract_strided_slice %0 {offsets = [1, 0], sizes = [1, 256], strides = [1, 1]} : vector<2x256xf32> to vector<1x256xf32>
    %c0_1 = arith.constant 0 : index
    %c0_2 = arith.constant 0 : index
    %3 = vector.load %arg2[%c0_1, %c0_2] : memref<2x2xf32, #tpu.memory_space<vmem>>, vector<2x2xf32>
    %4 = vector.extract_strided_slice %3 {offsets = [0, 0], sizes = [2, 1], strides = [1, 1]} : vector<2x2xf32> to vector<2x1xf32>
    %5 = vector.broadcast %4 : vector<2x1xf32> to vector<2x256xf32>
    %6 = vector.broadcast %1 : vector<1x256xf32> to vector<2x256xf32>
    %7 = arith.mulf %5, %6 : vector<2x256xf32>
    %8 = vector.extract_strided_slice %3 {offsets = [0, 1], sizes = [2, 1], strides = [1, 1]} : vector<2x2xf32> to vector<2x1xf32>
    %9 = vector.broadcast %8 : vector<2x1xf32> to vector<2x256xf32>
    %10 = vector.broadcast %2 : vector<1x256xf32> to vector<2x256xf32>
    %11 = arith.mulf %9, %10 : vector<2x256xf32>
    %12 = arith.addf %7, %11 : vector<2x256xf32>
    %c0_3 = arith.constant 0 : index
    %c0_4 = arith.constant 0 : index
    %13 = vector.load %arg3[%c0_3, %c0_4] : memref<2x1xf32, #tpu.memory_space<vmem>>, vector<2x1xf32>
    %14 = vector.broadcast %13 : vector<2x1xf32> to vector<2x256xf32>
    %15 = arith.addf %12, %14 : vector<2x256xf32>
    %16 = arith.negf %15 : vector<2x256xf32>
    %17 = math.exp %16 : vector<2x256xf32>
    %cst = arith.constant 1.000000e+00 : f32
    %18 = vector.broadcast %cst : f32 to vector<2x256xf32>
    %19 = arith.addf %18, %17 : vector<2x256xf32>
    %20 = arith.divf %18, %19 : vector<2x256xf32>
    %21 = arith.mulf %20, %0 : vector<2x256xf32>
    %22 = vector.extract_strided_slice %21 {offsets = [0, 0], sizes = [1, 256], strides = [1, 1]} : vector<2x256xf32> to vector<1x256xf32>
    %23 = vector.extract_strided_slice %21 {offsets = [1, 0], sizes = [1, 256], strides = [1, 1]} : vector<2x256xf32> to vector<1x256xf32>
    %c0_5 = arith.constant 0 : index
    %c0_6 = arith.constant 0 : index
    %24 = vector.load %arg4[%c0_5, %c0_6] : memref<40x2xf32, #tpu.memory_space<vmem>>, vector<40x2xf32>
    %25 = vector.extract_strided_slice %24 {offsets = [0, 0], sizes = [40, 1], strides = [1, 1]} : vector<40x2xf32> to vector<40x1xf32>
    %26 = vector.broadcast %25 : vector<40x1xf32> to vector<40x256xf32>
    %27 = vector.broadcast %22 : vector<1x256xf32> to vector<40x256xf32>
    %28 = arith.mulf %26, %27 : vector<40x256xf32>
    %29 = vector.extract_strided_slice %24 {offsets = [0, 1], sizes = [40, 1], strides = [1, 1]} : vector<40x2xf32> to vector<40x1xf32>
    %30 = vector.broadcast %29 : vector<40x1xf32> to vector<40x256xf32>
    %31 = vector.broadcast %23 : vector<1x256xf32> to vector<40x256xf32>
    %32 = arith.mulf %30, %31 : vector<40x256xf32>
    %33 = arith.addf %28, %32 : vector<40x256xf32>
    %c0_7 = arith.constant 0 : index
    %c0_8 = arith.constant 0 : index
    %34 = vector.load %arg5[%c0_7, %c0_8] : memref<40x1xf32, #tpu.memory_space<vmem>>, vector<40x1xf32>
    %35 = vector.broadcast %34 : vector<40x1xf32> to vector<40x256xf32>
    %36 = arith.addf %33, %35 : vector<40x256xf32>
    %cst_9 = arith.constant 0.000000e+00 : f32
    %37 = vector.broadcast %cst_9 : f32 to vector<40x256xf32>
    %38 = arith.maximumf %36, %37 : vector<40x256xf32>
    %c0_10 = arith.constant 0 : index
    %c0_11 = arith.constant 0 : index
    %39 = vector.load %arg6[%c0_10, %c0_11] : memref<40x1xf32, #tpu.memory_space<vmem>>, vector<40x1xf32>
    %40 = vector.broadcast %39 : vector<40x1xf32> to vector<40x256xf32>
    %41 = arith.mulf %40, %38 : vector<40x256xf32>
    %cst_12 = arith.constant dense<0.000000e+00> : vector<256xf32>
    %42 = vector.multi_reduction <add>, %41, %cst_12 [0] : vector<40x256xf32> to vector<256xf32>
    %43 = vector.shape_cast %42 : vector<256xf32> to vector<1x256xf32>
    %c0_13 = arith.constant 0 : index
    %c0_14 = arith.constant 0 : index
    %44 = vector.load %arg7[%c0_13, %c0_14] : memref<1x1xf32, #tpu.memory_space<vmem>>, vector<1x1xf32>
    %45 = vector.broadcast %44 : vector<1x1xf32> to vector<1x256xf32>
    %46 = arith.addf %43, %45 : vector<1x256xf32>
    %c0_15 = arith.constant 0 : index
    %c0_16 = arith.constant 0 : index
    %47 = vector.load %arg8[%c0_15, %c0_16] : memref<1x256xf32, #tpu.memory_space<vmem>>, vector<1x256xf32>
    tpu.vector_store %arg8[%c0_15, %c0_16], %46 {strides = array<i32>} : memref<1x256xf32, #tpu.memory_space<vmem>>, vector<1x256xf32>,
    return
  }
  func.func @transform_0(%arg0: i32) -> (i32, i32) {
    %c0_i32 = arith.constant 0 : i32
    %c0_i32_0 = arith.constant 0 : i32
    return %c0_i32, %arg0 : i32, i32
  }
  func.func @transform_1(%arg0: i32) -> (i32, i32) {
    %c0_i32 = arith.constant 0 : i32
    %c0_i32_0 = arith.constant 0 : i32
    %c0_i32_1 = arith.constant 0 : i32
    return %c0_i32, %c0_i32_0 : i32, i32
  }
  func.func @transform_2(%arg0: i32) -> (i32, i32) {
    %c0_i32 = arith.constant 0 : i32
    %c0_i32_0 = arith.constant 0 : i32
    %c0_i32_1 = arith.constant 0 : i32
    return %c0_i32, %c0_i32_0 : i32, i32
  }
  func.func @transform_3(%arg0: i32) -> (i32, i32) {
    %c0_i32 = arith.constant 0 : i32
    %c0_i32_0 = arith.constant 0 : i32
    %c0_i32_1 = arith.constant 0 : i32
    return %c0_i32, %c0_i32_0 : i32, i32
  }
  func.func @transform_4(%arg0: i32) -> (i32, i32) {
    %c0_i32 = arith.constant 0 : i32
    %c0_i32_0 = arith.constant 0 : i32
    %c0_i32_1 = arith.constant 0 : i32
    return %c0_i32, %c0_i32_0 : i32, i32
  }
  func.func @transform_5(%arg0: i32) -> (i32, i32) {
    %c0_i32 = arith.constant 0 : i32
    %c0_i32_0 = arith.constant 0 : i32
    %c0_i32_1 = arith.constant 0 : i32
    return %c0_i32, %c0_i32_0 : i32, i32
  }
  func.func @transform_6(%arg0: i32) -> (i32, i32) {
    %c0_i32 = arith.constant 0 : i32
    %c0_i32_0 = arith.constant 0 : i32
    %c0_i32_1 = arith.constant 0 : i32
    return %c0_i32, %c0_i32_0 : i32, i32
  }
  func.func @transform_7(%arg0: i32) -> (i32, i32) {
    %c0_i32 = arith.constant 0 : i32
    %c0_i32_0 = arith.constant 0 : i32
    return %c0_i32, %arg0 : i32, i32
  }
}

</mosaic_0001>

<llo_original>
// kernel: tpu_custom_call.1
$region0: #{tpu_custom_call.1}
  #allocation0 [shape = 'u32[]', space=smem, size = 0x4, offset = 0x4, fixed_abs, tag = 'smem constant byte address 0x4 - core index']
  #allocation1 [shape = 'u32[72,128]{1,0:T(1,128)}', space=vmem, size = 0x9000, scoped, tag = 'internal scratch']
  #allocation2 [shape = 'f32[1,1]{1,0:T(1,128)S(1)}', space=vmem, size = 0x200, scoped, tag = 'scoped memory for tpu_custom_call.1']
  %s0 = inlined_call_operand.vmem [shape: f32[2,768], index: 0, kind: input, shape index: {}]
  %s1 = inlined_call_operand.vmem [shape: f32[2,2], index: 1, kind: input, shape index: {}]
  %s2 = inlined_call_operand.vmem [shape: f32[2,1], index: 2, kind: input, shape index: {}]
  %s3 = inlined_call_operand.vmem [shape: f32[40,2], index: 3, kind: input, shape index: {}]
  %s4 = inlined_call_operand.vmem [shape: f32[40,1], index: 4, kind: input, shape index: {}]
  %s5 = inlined_call_operand.vmem [shape: f32[40,1], index: 5, kind: input, shape index: {}]
  %s6 = inlined_call_operand.<no memory space> [shape: f32[1,1], index: 6, kind: input, shape index: {}]
  %s7 = inlined_call_operand.hbm [shape: f32[1,768], index: 7, kind: output, shape index: {}]
  %s8 = sld [smem:[#allocation0]]
  $region61: #{tpu_custom_call.1} parent=0
    _
  %s10 = ssub.s32 1, %s8
  %s11 = scalar_select 0, %s10, %s8
  %v12 = vstv %s6
  %13 = vst [vmem:[#allocation2] sm:$0x1] %v12
  $region1: #{tpu_custom_call.1} parent=0
    #allocation3 [shape = 'u8[2048]{0}', space=vmem, size = 0x800, scoped, tag = 'output window, operand 0']
    #allocation4 [shape = 's32[2]{0}', space=sflag, size = 0x8, scoped, tag = 'scoped memory for tpu_custom_call.1']
    %14 = vsyncpa [#allocation4], 0
    %s15 = scalar_lea.sflag [#allocation4], 1
    %16 = vsyncpa %s15, 0
    loop: start=0, step=1, limit=5
    $region2: #{tpu_custom_call.1} parent=1 // loop_pre_header
      _
    $region3: #{tpu_custom_call.1} parent=1 // loop_header
      %s18 = sphi 0, %s22
      %p19 = scmp.ge.s32.totalorder %s18, 5
      %s28 = sphi 0, %s30
      %s31 = sphi 0, %s28
      %s32 = sphi 0, %s31
      %s48 = sphi 0, %s32
      %s52 = sphi 0, %s52
      %s54 = sphi 0, %s52
      %s55 = sphi 0, %s54
      %s69 = sphi 0, %s55
      %s73 = sphi 0, %s73
      %s75 = sphi 0, %s73
      %s76 = sphi 0, %s75
      %s90 = sphi 0, %s76
      %s94 = sphi 0, %s94
      %s96 = sphi 0, %s94
      %s97 = sphi 0, %s96
      %s111 = sphi 0, %s97
      %s115 = sphi 0, %s115
      %s117 = sphi 0, %s115
      %s118 = sphi 0, %s117
      %s132 = sphi 0, %s118
      %s136 = sphi 0, %s136
      %s138 = sphi 0, %s136
      %s139 = sphi 0, %s138
      %s153 = sphi 0, %s139
      %s157 = sphi 0, %s157
      %s159 = sphi 0, %s157
      %s160 = sphi 0, %s159
      %s174 = sphi 0, %s160
      %s180 = sphi 0, %s182
      %s183 = sphi 0, %s180
      %s184 = sphi 0, %s183
      %s200 = sphi 0, %s184
    $region4: #{tpu_custom_call.1} parent=1 // loop_header_branch
      %21 = sbr.rel (%p19) target = $region8
    $region5: #{tpu_custom_call.1} parent=1 // loop_body
      %s23 = ssub.s32 %s18, 1
      %s24 = ssub.s32 %s18, 2
      %s25 = sadd.s32 %s18, 1
      %s26 = ssub.s32 %s18, %s25
      %p27 = scmp.eq.s32.totalorder %s26, 0
      %s29 = sadd.s32 %s28, 1
      %s30 = scalar_select %p27, %s28, %s29
      %p33 = pneg %p27
      %p34 = scmp.eq.s32.totalorder %s18, 2
      %p35 = por %p33, %p34
      %p36 = scmp.ne.s32.totalorder %s28, %s31
      %p37 = scmp.eq.s32.totalorder %s18, 0
      %p38 = por %p36, %p37
      %p39 = scmp.ne.s32.totalorder %s28, %s31
      %p40 = scmp.eq.s32.totalorder %s23, 2
      %p41 = por %p39, %p40
      %p42 = scmp.ne.s32.totalorder %s31, %s32
      %p43 = scmp.eq.s32.totalorder %s23, 0
      %p44 = por %p42, %p43
      %p45 = scmp.ne.s32.totalorder %s31, %s32
      %p46 = scmp.eq.s32.totalorder %s24, 2
      %p47 = por %p45, %p46
      %p49 = scmp.ne.s32.totalorder %s32, %s48
      %p50 = scmp.eq.s32.totalorder %s24, 0
      %p51 = por %p49, %p50
      %s53 = sadd.s32 %s52, 1
      %p56 = scmp.eq.s32.totalorder %s18, 2
      %p57 = scmp.ne.s32.totalorder %s52, %s54
      %p58 = scmp.eq.s32.totalorder %s18, 0
      %p59 = por %p57, %p58
      %p60 = scmp.ne.s32.totalorder %s52, %s54
      %p61 = scmp.eq.s32.totalorder %s23, 2
      %p62 = por %p60, %p61
      %p63 = scmp.ne.s32.totalorder %s54, %s55
      %p64 = scmp.eq.s32.totalorder %s23, 0
      %p65 = por %p63, %p64
      %p66 = scmp.ne.s32.totalorder %s54, %s55
      %p67 = scmp.eq.s32.totalorder %s24, 2
      %p68 = por %p66, %p67
      %p70 = scmp.ne.s32.totalorder %s55, %s69
      %p71 = scmp.eq.s32.totalorder %s24, 0
      %p72 = por %p70, %p71
      %s74 = sadd.s32 %s73, 1
      %p77 = scmp.eq.s32.totalorder %s18, 2
      %p78 = scmp.ne.s32.totalorder %s73, %s75
      %p79 = scmp.eq.s32.totalorder %s18, 0
      %p80 = por %p78, %p79
      %p81 = scmp.ne.s32.totalorder %s73, %s75
      %p82 = scmp.eq.s32.totalorder %s23, 2
      %p83 = por %p81, %p82
      %p84 = scmp.ne.s32.totalorder %s75, %s76
      %p85 = scmp.eq.s32.totalorder %s23, 0
      %p86 = por %p84, %p85
      %p87 = scmp.ne.s32.totalorder %s75, %s76
      %p88 = scmp.eq.s32.totalorder %s24, 2
      %p89 = por %p87, %p88
      %p91 = scmp.ne.s32.totalorder %s76, %s90
      %p92 = scmp.eq.s32.totalorder %s24, 0
      %p93 = por %p91, %p92
      %s95 = sadd.s32 %s94, 1
      %p98 = scmp.eq.s32.totalorder %s18, 2
      %p99 = scmp.ne.s32.totalorder %s94, %s96
      %p100 = scmp.eq.s32.totalorder %s18, 0
      %p101 = por %p99, %p100
      %p102 = scmp.ne.s32.totalorder %s94, %s96
      %p103 = scmp.eq.s32.totalorder %s23, 2
      %p104 = por %p102, %p103
      %p105 = scmp.ne.s32.totalorder %s96, %s97
      %p106 = scmp.eq.s32.totalorder %s23, 0
      %p107 = por %p105, %p106
      %p108 = scmp.ne.s32.totalorder %s96, %s97
      %p109 = scmp.eq.s32.totalorder %s24, 2
      %p110 = por %p108, %p109
      %p112 = scmp.ne.s32.totalorder %s97, %s111
      %p113 = scmp.eq.s32.totalorder %s24, 0
      %p114 = por %p112, %p113
      %s116 = sadd.s32 %s115, 1
      %p119 = scmp.eq.s32.totalorder %s18, 2
      %p120 = scmp.ne.s32.totalorder %s115, %s117
      %p121 = scmp.eq.s32.totalorder %s18, 0
      %p122 = por %p120, %p121
      %p123 = scmp.ne.s32.totalorder %s115, %s117
      %p124 = scmp.eq.s32.totalorder %s23, 2
      %p125 = por %p123, %p124
      %p126 = scmp.ne.s32.totalorder %s117, %s118
      %p127 = scmp.eq.s32.totalorder %s23, 0
      %p128 = por %p126, %p127
      %p129 = scmp.ne.s32.totalorder %s117, %s118
      %p130 = scmp.eq.s32.totalorder %s24, 2
      %p131 = por %p129, %p130
      %p133 = scmp.ne.s32.totalorder %s118, %s132
      %p134 = scmp.eq.s32.totalorder %s24, 0
      %p135 = por %p133, %p134
      %s137 = sadd.s32 %s136, 1
      %p140 = scmp.eq.s32.totalorder %s18, 2
      %p141 = scmp.ne.s32.totalorder %s136, %s138
      %p142 = scmp.eq.s32.totalorder %s18, 0
      %p143 = por %p141, %p142
      %p144 = scmp.ne.s32.totalorder %s136, %s138
      %p145 = scmp.eq.s32.totalorder %s23, 2
      %p146 = por %p144, %p145
      %p147 = scmp.ne.s32.totalorder %s138, %s139
      %p148 = scmp.eq.s32.totalorder %s23, 0
      %p149 = por %p147, %p148
      %p150 = scmp.ne.s32.totalorder %s138, %s139
      %p151 = scmp.eq.s32.totalorder %s24, 2
      %p152 = por %p150, %p151
      %p154 = scmp.ne.s32.totalorder %s139, %s153
      %p155 = scmp.eq.s32.totalorder %s24, 0
      %p156 = por %p154, %p155
      %s158 = sadd.s32 %s157, 1
      %p161 = scmp.eq.s32.totalorder %s18, 2
      %p162 = scmp.ne.s32.totalorder %s157, %s159
      %p163 = scmp.eq.s32.totalorder %s18, 0
      %p164 = por %p162, %p163
      %p165 = scmp.ne.s32.totalorder %s157, %s159
      %p166 = scmp.eq.s32.totalorder %s23, 2
      %p167 = por %p165, %p166
      %p168 = scmp.ne.s32.totalorder %s159, %s160
      %p169 = scmp.eq.s32.totalorder %s23, 0
      %p170 = por %p168, %p169
      %p171 = scmp.ne.s32.totalorder %s159, %s160
      %p172 = scmp.eq.s32.totalorder %s24, 2
      %p173 = por %p171, %p172
      %p175 = scmp.ne.s32.totalorder %s160, %s174
      %p176 = scmp.eq.s32.totalorder %s24, 0
      %p177 = por %p175, %p176
      %s178 = ssub.s32 %s18, %s25
      %p179 = scmp.eq.s32.totalorder %s178, 0
      %s181 = sadd.s32 %s180, 1
      %s182 = scalar_select %p179, %s180, %s181
      %p185 = pneg %p179
      %p186 = scmp.eq.s32.totalorder %s18, 2
      %p187 = por %p185, %p186
      %p188 = scmp.ne.s32.totalorder %s180, %s183
      %p189 = scmp.eq.s32.totalorder %s18, 0
      %p190 = por %p188, %p189
      %p191 = scmp.ne.s32.totalorder %s180, %s183
      %p192 = scmp.eq.s32.totalorder %s23, 2
      %p193 = por %p191, %p192
      %p194 = scmp.ne.s32.totalorder %s183, %s184
      %p195 = scmp.eq.s32.totalorder %s23, 0
      %p196 = por %p194, %p195
      %p197 = scmp.ne.s32.totalorder %s183, %s184
      %p198 = scmp.eq.s32.totalorder %s24, 2
      %p199 = por %p197, %p198
      %p201 = scmp.ne.s32.totalorder %s184, %s200
      %p202 = scmp.eq.s32.totalorder %s24, 0
      %p203 = por %p201, %p202
      %p204 = scmp.le.s32.totalorder 1, %s18
      %p205 = scmp.lt.s32.totalorder %s18, 4
      %p206 = pnand %p204, %p205
      %p207 = pneg %p206
      // Predicated region
      $region9: #{tpu_custom_call.1} parent=5 // pred_check
        _
      $region10: #{tpu_custom_call.1} parent=5 // pred_check_branch
        %209 = sbr.rel (%p206) target = $region12
      $region11: #{tpu_custom_call.1} parent=5 // pred_region
        %s210 = ssub.s32 %s18, 1
        // Predicated region
        $region13: #{tpu_custom_call.1} parent=11 // pred_check
          %p211 = pneg %p65
        $region14: #{tpu_custom_call.1} parent=11 // pred_check_branch
          %213 = sbr.rel (%p211) target = $region16
        $region15: #{tpu_custom_call.1} parent=11 // pred_region
          _
        $region16: #{tpu_custom_call.1} parent=11 // pred_fallthru
          _
        // Predicated region
        $region17: #{tpu_custom_call.1} parent=11 // pred_check
          %p214 = pneg %p86
        $region18: #{tpu_custom_call.1} parent=11 // pred_check_branch
          %216 = sbr.rel (%p214) target = $region20
        $region19: #{tpu_custom_call.1} parent=11 // pred_region
          _
        $region20: #{tpu_custom_call.1} parent=11 // pred_fallthru
          _
        // Predicated region
        $region21: #{tpu_custom_call.1} parent=11 // pred_check
          %p217 = pneg %p107
        $region22: #{tpu_custom_call.1} parent=11 // pred_check_branch
          %219 = sbr.rel (%p217) target = $region24
        $region23: #{tpu_custom_call.1} parent=11 // pred_region
          _
        $region24: #{tpu_custom_call.1} parent=11 // pred_fallthru
          _
        // Predicated region
        $region25: #{tpu_custom_call.1} parent=11 // pred_check
          %p220 = pneg %p128
        $region26: #{tpu_custom_call.1} parent=11 // pred_check_branch
          %222 = sbr.rel (%p220) target = $region28
        $region27: #{tpu_custom_call.1} parent=11 // pred_region
          _
        $region28: #{tpu_custom_call.1} parent=11 // pred_fallthru
          _
        // Predicated region
        $region29: #{tpu_custom_call.1} parent=11 // pred_check
          %p223 = pneg %p149
        $region30: #{tpu_custom_call.1} parent=11 // pred_check_branch
          %225 = sbr.rel (%p223) target = $region32
        $region31: #{tpu_custom_call.1} parent=11 // pred_region
          _
        $region32: #{tpu_custom_call.1} parent=11 // pred_fallthru
          _
        // Predicated region
        $region33: #{tpu_custom_call.1} parent=11 // pred_check
          %p226 = pneg %p170
        $region34: #{tpu_custom_call.1} parent=11 // pred_check_branch
          %228 = sbr.rel (%p226) target = $region36
        $region35: #{tpu_custom_call.1} parent=11 // pred_region
          _
        $region36: #{tpu_custom_call.1} parent=11 // pred_fallthru
          _
      $region12: #{tpu_custom_call.1} parent=5 // pred_fallthru
        _
      %p229 = scmp.lt.s32.totalorder %s18, 3
      // Predicated region
      $region37: #{tpu_custom_call.1} parent=5 // pred_check
        %p230 = pneg %p229
      $region38: #{tpu_custom_call.1} parent=5 // pred_check_branch
        %232 = sbr.rel (%p230) target = $region40
      $region39: #{tpu_custom_call.1} parent=5 // pred_region
        // Predicated region
        $region41: #{tpu_custom_call.1} parent=39 // pred_check
          %p233 = pneg %p38
        $region42: #{tpu_custom_call.1} parent=39 // pred_check_branch
          %235 = sbr.rel (%p233) target = $region44
        $region43: #{tpu_custom_call.1} parent=39 // pred_region
          %s236 = smul.u32 2, %s18
          %p237 = scmp.lt.s32.totalorder %s236, 5
          %s238 = scalar_select %p237, %s236, 5
          %s239 = smul.addr %s238, 2
          %s240 = scalar_lea.vmem %s0, %s239
          %s241 = smul.u32 2, %s18
        $region44: #{tpu_custom_call.1} parent=39 // pred_fallthru
          _
      $region40: #{tpu_custom_call.1} parent=5 // pred_fallthru
        _
      %p242 = scmp.le.s32.totalorder 1, %s18
      %p243 = scmp.lt.s32.totalorder %s18, 4
      %p244 = pnand %p242, %p243
      %p245 = pneg %p244
      // Predicated region
      $region45: #{tpu_custom_call.1} parent=5 // pred_check
        _
      $region46: #{tpu_custom_call.1} parent=5 // pred_check_branch
        %247 = sbr.rel (%p244) target = $region48
      $region47: #{tpu_custom_call.1} parent=5 // pred_region
        %s248 = ssub.s32 %s18, 1
        %s249 = smul.u32 2, %s23
        %p250 = scmp.lt.s32.totalorder %s249, 5
        %s251 = scalar_select %p250, %s249, 5
        %s252 = smul.addr %s251, 2
        %s253 = scalar_lea.vmem %s0, %s252
        %p254 = pneg %p44
        %p255 = pneg %p41
        %p256 = pneg %p65
        %p257 = pneg %p62
        %p258 = pneg %p86
        %p259 = pneg %p83
        %p260 = pneg %p107
        %p261 = pneg %p104
        %p262 = pneg %p128
        %p263 = pneg %p125
        %p264 = pneg %p149
        %p265 = pneg %p146
        %p266 = pneg %p170
        %p267 = pneg %p167
        %p268 = pneg %p196
        %p269 = pneg %p193
        %s270 = sand.u32 %s183, 1
        %s271 = scalar_lea.sflag [#allocation4], %s270
        %s272 = sand.u32 %s183, 1
        %s273 = smul.addr %s272, 2
        %s274 = scalar_lea.vmem [#allocation3], %s273
        %s275 = smul.u32 2, %s23
        %p276 = scmp.lt.s32.totalorder %s275, 5
        %s277 = scalar_select %p276, %s275, 5
        %s278 = smul.addr %s277, 2
        %s279 = scalar_lea.vmem %s0, %s278
        %s280 = smul.u32 2, %s23
        %s281 = smul.u32 2, %s23
        %v282 = vld [vmem:[%s279] sm:$0xf]
        %v283 = vld [vmem:[%s1] sm:$0x3]
        %285 = vset.pattern.permute.xlu0 0
        %286 = vperm.xlu0 %285, %v283
        %v287 = vpop.permute.xlu0 %286
        %v290 = vperm.slane %v282, 0
        %v291 = vperm.slane %v282, 2
        %v294 = vperm.slane %v290, 0
        %v295 = vperm.slane %v291, 0
        %v296 = vmul.f32 %v287, %v294
        %v297 = vmul.f32 %v287, %v295
        %298 = vset.pattern.permute.xlu0 1
        %299 = vperm.xlu0 %298, %v283
        %v300 = vpop.permute.xlu0 %299
        %v302 = vperm.slane %v282, 1
        %v303 = vperm.slane %v282, 3
        %v306 = vperm.slane %v302, 1
        %v307 = vperm.slane %v303, 1
        %v308 = vmul.f32 %v300, %v306
        %v309 = vmul.f32 %v300, %v307
        %v310 = vadd.f32 %v296, %v308
        %v311 = vadd.f32 %v297, %v309
        %v312 = vld [vmem:[%s2] sm:$0x3]
        %314 = vset.pattern.permute.xlu0 0
        %315 = vperm.xlu0 %314, %v312
        %v316 = vpop.permute.xlu0 %315
        %v318 = vadd.f32 %v310, %v316
        %v319 = vadd.f32 %v311, %v316
        %v320 = vxor.u32 %v318, 2147483648
        %v321 = vxor.u32 %v319, 2147483648
        %v322 = vmul.f32 %v320, 1.442695
        %v323 = vpow.pop %v322
        %v324 = vmul.f32 %v321, 1.442695
        %v325 = vpow.pop %v324
        %v326 = vadd.f32 %v323, 1.0
        %v327 = vadd.f32 %v325, 1.0
        %v328 = vrcp.pop %v326
        %v329 = vmul.f32 %v326, %v328
        %v330 = vsub.f32 1.0, %v329
        %v331 = vmul.f32 %v328, %v330
        %v332 = vadd.f32 %v328, %v331
        %vm333 = vweird.f32 %v326
        %vm334 = vweird.f32 %v328
        %vm335 = vmor %vm333, %vm334
        %v336 = vsel %vm335, %v328, %v332
        %v337 = vand.u32 2147483647, %v326
        %vm338 = vcmp.eq.f32.partialorder %v337, 8.507059e+37
        %v339 = vand.u32 %v326, 2147483648
        %v340 = vor.u32 1.1754944e-38, %v339
        %v341 = vsel %vm338, %v340, %v336
        %v342 = vmul.f32 1.0, %v341
        %v343 = vrcp.pop %v327
        %v344 = vmul.f32 %v327, %v343
        %v345 = vsub.f32 1.0, %v344
        %v346 = vmul.f32 %v343, %v345
        %v347 = vadd.f32 %v343, %v346
        %vm348 = vweird.f32 %v327
        %vm349 = vweird.f32 %v343
        %vm350 = vmor %vm348, %vm349
        %v351 = vsel %vm350, %v343, %v347
        %v352 = vand.u32 2147483647, %v327
        %vm353 = vcmp.eq.f32.partialorder %v352, 8.507059e+37
        %v354 = vand.u32 %v327, 2147483648
        %v355 = vor.u32 1.1754944e-38, %v354
        %v356 = vsel %vm353, %v355, %v351
        %v357 = vmul.f32 1.0, %v356
        %358 = vst [vmem:[#allocation1] ss:$4 sm:$0xff] %v282
        %v359 = vld.sshfl [vmem:[#allocation1] sm:$0xff pattern:$0x73625140]
        %v360 = vld.sshfl [vmem:[#allocation1 + $0x8] sm:$0xff pattern:$0x73625140]
        %v363 = vmul.f32 %v342, %v359
        %v364 = vmul.f32 %v357, %v360
        %v365 = vld [vmem:[%s3] sm:$0xff]
        %v366 = vld [vmem:[%s3 + $0x8] sm:$0xff]
        %v367 = vld [vmem:[%s3 + $0x10] sm:$0xff]
        %v368 = vld [vmem:[%s3 + $0x18] sm:$0xff]
        %v369 = vld [vmem:[%s3 + $0x20] sm:$0xff]
        %371 = vset.pattern.permute.xlu0 0
        %372 = vperm.xlu0 %371, %v365
        %v373 = vpop.permute.xlu0 %372
        %376 = vset.pattern.permute.xlu0 0
        %377 = vperm.xlu0 %376, %v366
        %v378 = vpop.permute.xlu0 %377
        %381 = vset.pattern.permute.xlu0 0
        %382 = vperm.xlu0 %381, %v367
        %v383 = vpop.permute.xlu0 %382
        %386 = vset.pattern.permute.xlu0 0
        %387 = vperm.xlu0 %386, %v368
        %v388 = vpop.permute.xlu0 %387
        %391 = vset.pattern.permute.xlu0 0
        %392 = vperm.xlu0 %391, %v369
        %v393 = vpop.permute.xlu0 %392
        %v395 = vperm.slane %v363, 0
        %v396 = vperm.slane %v364, 0
        %v397 = vmul.f32 %v373, %v395
        %v398 = vmul.f32 %v373, %v396
        %v399 = vmul.f32 %v378, %v395
        %v400 = vmul.f32 %v378, %v396
        %v401 = vmul.f32 %v383, %v395
        %v402 = vmul.f32 %v383, %v396
        %v403 = vmul.f32 %v388, %v395
        %v404 = vmul.f32 %v388, %v396
        %v405 = vmul.f32 %v393, %v395
        %v406 = vmul.f32 %v393, %v396
        %407 = vset.pattern.permute.xlu0 1
        %408 = vperm.xlu0 %407, %v365
        %v409 = vpop.permute.xlu0 %408
        %411 = vset.pattern.permute.xlu0 1
        %412 = vperm.xlu0 %411, %v366
        %v413 = vpop.permute.xlu0 %412
        %415 = vset.pattern.permute.xlu0 1
        %416 = vperm.xlu0 %415, %v367
        %v417 = vpop.permute.xlu0 %416
        %419 = vset.pattern.permute.xlu0 1
        %420 = vperm.xlu0 %419, %v368
        %v421 = vpop.permute.xlu0 %420
        %423 = vset.pattern.permute.xlu0 1
        %424 = vperm.xlu0 %423, %v369
        %v425 = vpop.permute.xlu0 %424
        %v427 = vperm.slane %v363, 1
        %v428 = vperm.slane %v364, 1
        %v429 = vmul.f32 %v409, %v427
        %v430 = vmul.f32 %v409, %v428
        %v431 = vmul.f32 %v413, %v427
        %v432 = vmul.f32 %v413, %v428
        %v433 = vmul.f32 %v417, %v427
        %v434 = vmul.f32 %v417, %v428
        %v435 = vmul.f32 %v421, %v427
        %v436 = vmul.f32 %v421, %v428
        %v437 = vmul.f32 %v425, %v427
        %v438 = vmul.f32 %v425, %v428
        %v439 = vadd.f32 %v397, %v429
        %v440 = vadd.f32 %v398, %v430
        %v441 = vadd.f32 %v399, %v431
        %v442 = vadd.f32 %v400, %v432
        %v443 = vadd.f32 %v401, %v433
        %v444 = vadd.f32 %v402, %v434
        %v445 = vadd.f32 %v403, %v435
        %v446 = vadd.f32 %v404, %v436
        %v447 = vadd.f32 %v405, %v437
        %v448 = vadd.f32 %v406, %v438
        %v449 = vld [vmem:[%s4] sm:$0xff]
        %v450 = vld [vmem:[%s4 + $0x8] sm:$0xff]
        %v451 = vld [vmem:[%s4 + $0x10] sm:$0xff]
        %v452 = vld [vmem:[%s4 + $0x18] sm:$0xff]
        %v453 = vld [vmem:[%s4 + $0x20] sm:$0xff]
        %455 = vset.pattern.permute.xlu0 0
        %456 = vperm.xlu0 %455, %v449
        %v457 = vpop.permute.xlu0 %456
        %460 = vset.pattern.permute.xlu0 0
        %461 = vperm.xlu0 %460, %v450
        %v462 = vpop.permute.xlu0 %461
        %465 = vset.pattern.permute.xlu0 0
        %466 = vperm.xlu0 %465, %v451
        %v467 = vpop.permute.xlu0 %466
        %470 = vset.pattern.permute.xlu0 0
        %471 = vperm.xlu0 %470, %v452
        %v472 = vpop.permute.xlu0 %471
        %475 = vset.pattern.permute.xlu0 0
        %476 = vperm.xlu0 %475, %v453
        %v477 = vpop.permute.xlu0 %476
        %v479 = vadd.f32 %v439, %v457
        %v480 = vadd.f32 %v440, %v457
        %v481 = vadd.f32 %v441, %v462
        %v482 = vadd.f32 %v442, %v462
        %v483 = vadd.f32 %v443, %v467
        %v484 = vadd.f32 %v444, %v467
        %v485 = vadd.f32 %v445, %v472
        %v486 = vadd.f32 %v446, %v472
        %v487 = vadd.f32 %v447, %v477
        %v488 = vadd.f32 %v448, %v477
        %v489 = vmax.f32 %v479, 0.0
        %v490 = vmax.f32 %v480, 0.0
        %v491 = vmax.f32 %v481, 0.0
        %v492 = vmax.f32 %v482, 0.0
        %v493 = vmax.f32 %v483, 0.0
        %v494 = vmax.f32 %v484, 0.0
        %v495 = vmax.f32 %v485, 0.0
        %v496 = vmax.f32 %v486, 0.0
        %v497 = vmax.f32 %v487, 0.0
        %v498 = vmax.f32 %v488, 0.0
        %v499 = vld [vmem:[%s5] sm:$0xff]
        %v500 = vld [vmem:[%s5 + $0x8] sm:$0xff]
        %v501 = vld [vmem:[%s5 + $0x10] sm:$0xff]
        %v502 = vld [vmem:[%s5 + $0x18] sm:$0xff]
        %v503 = vld [vmem:[%s5 + $0x20] sm:$0xff]
        %505 = vset.pattern.permute.xlu0 0
        %506 = vperm.xlu0 %505, %v499
        %v507 = vpop.permute.xlu0 %506
        %510 = vset.pattern.permute.xlu0 0
        %511 = vperm.xlu0 %510, %v500
        %v512 = vpop.permute.xlu0 %511
        %515 = vset.pattern.permute.xlu0 0
        %516 = vperm.xlu0 %515, %v501
        %v517 = vpop.permute.xlu0 %516
        %520 = vset.pattern.permute.xlu0 0
        %521 = vperm.xlu0 %520, %v502
        %v522 = vpop.permute.xlu0 %521
        %525 = vset.pattern.permute.xlu0 0
        %526 = vperm.xlu0 %525, %v503
        %v527 = vpop.permute.xlu0 %526
        %v529 = vmul.f32 %v507, %v489
        %v530 = vmul.f32 %v507, %v490
        %v531 = vmul.f32 %v512, %v491
        %v532 = vmul.f32 %v512, %v492
        %v533 = vmul.f32 %v517, %v493
        %v534 = vmul.f32 %v517, %v494
        %v535 = vmul.f32 %v522, %v495
        %v536 = vmul.f32 %v522, %v496
        %v537 = vmul.f32 %v527, %v497
        %v538 = vmul.f32 %v527, %v498
        %v539 = vadd.f32 %v529, %v531
        %v540 = vadd.f32 %v539, %v533
        %v541 = vadd.f32 %v540, %v535
        %v542 = vadd.f32 %v541, %v537
        %v543 = vrot.slane %v542, 4
        %v544 = vadd.f32 %v542, %v543
        %v545 = vrot.slane %v544, 2
        %v546 = vadd.f32 %v544, %v545
        %v547 = vrot.slane %v546, 1
        %v548 = vadd.f32 %v546, %v547
        %v549 = vadd.f32 %v530, %v532
        %v550 = vadd.f32 %v549, %v534
        %v551 = vadd.f32 %v550, %v536
        %v552 = vadd.f32 %v551, %v538
        %v553 = vrot.slane %v552, 4
        %v554 = vadd.f32 %v552, %v553
        %v555 = vrot.slane %v554, 2
        %v556 = vadd.f32 %v554, %v555
        %v557 = vrot.slane %v556, 1
        %v558 = vadd.f32 %v556, %v557
        %v559 = vld [vmem:[#allocation2] sm:$0x1]
        %561 = vset.pattern.permute.xlu0 0
        %562 = vperm.xlu0 %561, %v559
        %v563 = vpop.permute.xlu0 %562
        %v565 = vperm.slane %v563, 0
        %v566 = vadd.f32 %v548, %v565
        %v567 = vadd.f32 %v558, %v565
        %v570 = vrot.slane %v567, 7
        %vm571 = vcmask 1040384
        %v572 = vsel %vm571, %v566, %v570
        %v574 = vlaneseq
        %vm575 = vcmp.ge.s32.totalorder %v574, 0
        %vm576 = vcmp.lt.s32.totalorder %v574, 256
        %vm577 = vmand %vm575, %vm576
        %578 = vst.msk [vmem:[%s274] sm:$0x3] %vm577, %v572
        %s579 = sand.u32 %s183, 1
        %s580 = scalar_lea.sflag [#allocation4], %s579
        %s581 = sand.u32 %s183, 1
        %s582 = smul.addr %s581, 2
        %s583 = scalar_lea.vmem [#allocation3], %s582
        // Predicated region
        $region49: #{tpu_custom_call.1} parent=47 // pred_check
          %p584 = pneg %p193
        $region50: #{tpu_custom_call.1} parent=47 // pred_check_branch
          %586 = sbr.rel (%p584) target = $region52
        $region51: #{tpu_custom_call.1} parent=47 // pred_region
          %s587 = smul.u32 2, %s23
          %589 = vsyncadd %s580, 0
          %s590 = scalar_lea.hbm %s7, %s587
          %s592 = sshll.u32 %s583, 4
          %s593 = int_to_ptr.vmem [resolvable:$true] %s592
          %s594 = sshll.u32 %s590, 4
          %s595 = int_to_ptr.hbm [resolvable:$true] %s594
          %597 = dma.vmem_to_hbm [thread:$0]  %s593, 32, %s595, %s580
        $region52: #{tpu_custom_call.1} parent=47 // pred_fallthru
          _
      $region48: #{tpu_custom_call.1} parent=5 // pred_fallthru
        _
      %p598 = scmp.le.s32.totalorder 2, %s18
      // Predicated region
      $region53: #{tpu_custom_call.1} parent=5 // pred_check
        %p599 = pneg %p598
      $region54: #{tpu_custom_call.1} parent=5 // pred_check_branch
        %601 = sbr.rel (%p599) target = $region56
      $region55: #{tpu_custom_call.1} parent=5 // pred_region
        %s602 = ssub.s32 %s18, 2
        // Predicated region
        $region57: #{tpu_custom_call.1} parent=55 // pred_check
          %p603 = pneg %p199
        $region58: #{tpu_custom_call.1} parent=55 // pred_check_branch
          %605 = sbr.rel (%p603) target = $region60
        $region59: #{tpu_custom_call.1} parent=55 // pred_region
          %s606 = sand.u32 %s184, 1
          %s607 = scalar_lea.sflag [#allocation4], %s606
          %s608 = sand.u32 %s184, 1
          %s609 = smul.addr %s608, 2
          %s610 = scalar_lea.vmem [#allocation3], %s609
          %612 = dma.done %s607, 32
        $region60: #{tpu_custom_call.1} parent=55 // pred_fallthru
          _
      $region56: #{tpu_custom_call.1} parent=5 // pred_fallthru
        _
    $region6: #{tpu_custom_call.1} parent=1 // loop_footer
      %s22 = sadd.s32 1, %s18
    $region7: #{tpu_custom_call.1} parent=1 // loop_footer_branch
      %17 = sbr.rel target = $region3
    $region8: #{tpu_custom_call.1} parent=1 // loop_exit
      _
    %613 = vsyncpa [#allocation4], 1
    %s614 = scalar_lea.sflag [#allocation4], 1
    %615 = vsyncpa %s614, 1

</llo_original>
